<compile_context>
chip_gen: v6e
topology: v6e:2x2x1
jax: 0.10.0
libtpu: 0.0.40
codegen_flags: <defaults>
</compile_context>

<pallas_src>
import functools

import jax
import jax.numpy as jnp
from jax.experimental import pallas as pl
from jax.experimental.pallas import tpu as pltpu


_SQRT_2_OVER_PI = 0.7978845608028654  # sqrt(2/pi)


def _gelu_tanh(x):
    # nn.GELU(approximate='tanh'): 0.5*x*(1 + tanh(sqrt(2/pi)*(x + 0.044715*x^3))),
    # refactored as x*(1 + 0.044715*x*x) to drop one multiply.
    return 0.5 * x * (1.0 + jnp.tanh(_SQRT_2_OVER_PI * x * (1.0 + 0.044715 * x * x)))


def _round_up(n, m):
    return ((n + m - 1) // m) * m


def _tpu_config():
    """(is_v7x, has_bf16_vpu, vmem_capacity_bytes) — all decided at trace time."""
    kind = ""
    try:
        kind = jax.devices()[0].device_kind.lower()
    except Exception:
        pass
    is_v7 = "v7" in kind
    # bf16 VPU/EUP exists on v6e/v7x; v5e (and older) do not -> keep GELU in f32 there.
    has_bf16_vpu = ("v6" in kind) or is_v7
    vmem_cap = (64 << 20) if is_v7 else (128 << 20)
    try:
        vmem_cap = int(pltpu.get_tpu_info().vmem_capacity_bytes)
    except Exception:
        pass
    return is_v7, has_bf16_vpu, vmem_cap


# --------------------------------------------------------------------------- kernels


def mlp_kernel_resident(x_ref, w1_ref, b1_ref, w2_ref, b2_ref, o_ref, *, gelu_dtype):
    """Weights fully VMEM-resident; grid is (row_tiles,) only.

    x_ref:  (tm, Cp)  bf16 input rows
    w1_ref: (Cp, Hp)  bf16 fc weight (full, constant index map -> DMA'd once)
    b1_ref: (1,  Hp)  fc bias (gelu dtype)
    w2_ref: (Hp, Cp)  bf16 proj weight (full, constant index map)
    b2_ref: (1,  Cp)  f32 proj bias
    o_ref:  (tm, Cp)  output tile
    """
    h = jnp.dot(x_ref[...], w1_ref[...], preferred_element_type=jnp.float32)
    h = h.astype(gelu_dtype) + b1_ref[...]
    h = _gelu_tanh(h)
    acc = jnp.dot(h.astype(w2_ref.dtype), w2_ref[...],
                  preferred_element_type=jnp.float32)
    o_ref[...] = (acc + b2_ref[...]).astype(o_ref.dtype)


def mlp_kernel_chunked(x_ref, w1_ref, b1_ref, w2_ref, b2_ref, o_ref, acc_ref, *,
                       gelu_dtype):
    """Large-model fallback: grid axis 1 accumulates over H chunks.

    x_ref:  (tm, Cp)  bf16 input rows (constant over k -> fetched once per row tile)
    w1_ref: (Cp, th)  bf16 fc-weight chunk
    b1_ref: (1,  th)  fc-bias chunk (gelu dtype)
    w2_ref: (th, Cp)  bf16 proj-weight chunk
    b2_ref: (1,  Cp)  f32 proj-bias
    o_ref:  (tm, Cp)  output tile (written on the last H chunk)
    acc_ref:(tm, Cp)  f32 accumulator scratch
    """
    k = pl.program_id(1)

    @pl.when(k == 0)
    def _init():
        acc_ref[...] = jnp.zeros_like(acc_ref)

    h = jnp.dot(x_ref[...], w1_ref[...], preferred_element_type=jnp.float32)
    h = h.astype(gelu_dtype) + b1_ref[...]
    h = _gelu_tanh(h)
    acc_ref[...] += jnp.dot(h.astype(w2_ref.dtype), w2_ref[...],
                            preferred_element_type=jnp.float32)

    @pl.when(k == pl.num_programs(1) - 1)
    def _finalize():
        o_ref[...] = (acc_ref[...] + b2_ref[...]).astype(o_ref.dtype)


# --------------------------------------------------------------------------- wrapper


@functools.partial(jax.jit, static_argnames=("tm", "th", "compute_dtype"))
def mlp_pallas(x, w1, b1, w2, b2, *, tm=None, th=None, compute_dtype=jnp.bfloat16):
    """x: (B, T, C); w1: (C, H); b1: (1, H) or (H,); w2: (H, C); b2: (1, C) or (C,)."""
    B, T, C = x.shape
    H = w1.shape[1]
    M = B * T

    is_v7, has_bf16_vpu, vmem_cap = _tpu_config()
    bpe = jnp.dtype(compute_dtype).itemsize
    out_bpe = jnp.dtype(x.dtype).itemsize
    gelu_dtype = compute_dtype if (has_bf16_vpu and bpe == 2) else jnp.float32
    gelu_bpe = jnp.dtype(gelu_dtype).itemsize

    # Scoped-VMEM budget: ~15% headroom off physical capacity, capped at ~112 MiB
    # on 128-MiB chips (v5e/v6e) — on v7x this works out to ~54 MiB of its 64 MiB.
    budget = min(int(vmem_cap * 0.85), 112 << 20)

    # Lane-dense feature padding.
    Cp = _round_up(C, 128)
    Hp = _round_up(H, 128)

    # Row tile: big enough to be MXU-bound even when weights must be streamed.
    tm_align = 16 if bpe == 2 else 8
    tm_c = tm if tm is not None else (512 if is_v7 else 1024)
    tm_c = max(tm_align, _round_up(min(tm_c, M), tm_align))
    if is_v7 and M >= 2 * tm_align:
        # Guarantee >= 2 parallel row tiles so both v7x TensorCores have work.
        tm_c = min(tm_c, max(tm_align, _round_up((M + 1) // 2, tm_align)))

    def resident_need(t):
        return (2 * t * Cp * (bpe + out_bpe)        # x + out tiles, double buffered
                + 4 * Cp * Hp * bpe                 # w1 + w2 resident (2x safety)
                + 2 * (Hp * gelu_bpe + Cp * 4)      # biases
                + t * Hp * (4 + gelu_bpe)           # f32 matmul result + GELU output
                + t * Cp * 4)                       # f32 projection result

    # Prefer weight residency (biggest HBM-traffic win); shrink tm before giving up.
    resident = False
    for cand in dict.fromkeys((tm_c, min(tm_c, 512), min(tm_c, 256))):
        cand = max(tm_align, _round_up(cand, tm_align))
        if resident_need(cand) <= budget:
            tm_c, resident = cand, True
            break

    if resident:
        th_c = Hp
        vmem_need = resident_need(tm_c)
    else:
        # Large-model fallback: chunk H; th multiple of 256 for the 256-wide MXU.
        th_c = th if th is not None else (256 if is_v7 else 512)
        th_c = min(_round_up(th_c, 256), _round_up(Hp, 256))

        def chunked_need(t, h):
            return (2 * t * Cp * (bpe + out_bpe)    # x + out tiles
                    + 4 * Cp * h * bpe              # w1 + w2 chunks, double buffered
                    + 2 * (h * gelu_bpe + Cp * 4)   # bias chunks
                    + t * Cp * 4                    # f32 accumulator scratch
                    + t * h * (4 + gelu_bpe))       # hidden intermediates

        while chunked_need(tm_c, th_c) > budget and tm_c > 256:
            tm_c = max(256, _round_up(tm_c // 2, tm_align))
        while chunked_need(tm_c, th_c) > budget and th_c > 256:
            th_c = max(256, _round_up(th_c // 2, 256))
        Hp = _round_up(_round_up(H, 128), th_c)     # th must divide Hp
        vmem_need = chunked_need(tm_c, th_c)

    Mp = _round_up(M, tm_c)
    vmem_limit = int(min(max(vmem_need + (4 << 20), 16 << 20), budget))

    # Pad/cast only when needed.  NOTE: for repeated layer calls, pre-pad/pre-cast
    # the weights once outside this function; then these become no-ops.
    def pad2(a, rows, cols, dtype):
        if a.dtype != dtype:
            a = a.astype(dtype)
        pr, pc = rows - a.shape[0], cols - a.shape[1]
        if pr or pc:
            a = jnp.pad(a, ((0, pr), (0, pc)))
        return a

    x2 = pad2(x.reshape(M, C), Mp, Cp, compute_dtype)
    w1p = pad2(w1, Cp, Hp, compute_dtype)
    b1p = pad2(b1.reshape(1, -1), 1, Hp, gelu_dtype)
    w2p = pad2(w2, Hp, Cp, compute_dtype)
    b2p = pad2(b2.reshape(1, -1), 1, Cp, jnp.float32)

    n_row_tiles = Mp // tm_c
    weight_bytes = 2 * Cp * Hp * bpe
    cost = pl.CostEstimate(
        flops=4 * Mp * Cp * Hp,                     # two matmuls: 2*M*K*N each
        transcendentals=Mp * Hp,                    # one tanh per hidden element
        bytes_accessed=int(
            Mp * Cp * (bpe + out_bpe)               # x read + out write
            + (weight_bytes if resident else n_row_tiles * weight_bytes)
            + Hp * gelu_bpe + Cp * 4),
    )

    if resident:
        kernel = functools.partial(mlp_kernel_resident, gelu_dtype=gelu_dtype)
        grid_spec = pltpu.PrefetchScalarGridSpec(
            num_scalar_prefetch=0,
            grid=(n_row_tiles,),
            in_specs=[
                pl.BlockSpec((tm_c, Cp), lambda i: (i, 0)),   # x rows
                pl.BlockSpec((Cp, Hp), lambda i: (0, 0)),     # w1 (resident)
                pl.BlockSpec((1, Hp), lambda i: (0, 0)),      # b1
                pl.BlockSpec((Hp, Cp), lambda i: (0, 0)),     # w2 (resident)
                pl.BlockSpec((1, Cp), lambda i: (0, 0)),      # b2
            ],
            out_specs=pl.BlockSpec((tm_c, Cp), lambda i: (i, 0)),
        )
        dim_sem = ("parallel",)
    else:
        kernel = functools.partial(mlp_kernel_chunked, gelu_dtype=gelu_dtype)
        grid_spec = pltpu.PrefetchScalarGridSpec(
            num_scalar_prefetch=0,
            grid=(n_row_tiles, Hp // th_c),
            in_specs=[
                pl.BlockSpec((tm_c, Cp), lambda i, k: (i, 0)),  # x rows (const over k)
                pl.BlockSpec((Cp, th_c), lambda i, k: (0, k)),  # w1 chunk
                pl.BlockSpec((1, th_c), lambda i, k: (0, k)),   # b1 chunk
                pl.BlockSpec((th_c, Cp), lambda i, k: (k, 0)),  # w2 chunk
                pl.BlockSpec((1, Cp), lambda i, k: (0, 0)),     # b2
            ],
            out_specs=pl.BlockSpec((tm_c, Cp), lambda i, k: (i, 0)),
            scratch_shapes=[pltpu.VMEM((tm_c, Cp), jnp.float32)],
        )
        dim_sem = ("parallel", "arbitrary")

    out = pl.pallas_call(
        kernel,
        out_shape=jax.ShapeDtypeStruct((Mp, Cp), x.dtype),
        grid_spec=grid_spec,
        compiler_params=pltpu.CompilerParams(
            dimension_semantics=dim_sem,
            vmem_limit_bytes=vmem_limit,
        ),
        cost_estimate=cost,
    )(x2, w1p, b1p, w2p, b2p)

    return out[:M, :C].reshape(B, T, C)


def mlp_reference(x, w1, b1, w2, b2):
    h = jnp.einsum("btc,ch->bth", x, w1) + b1.reshape(-1)
    h = _gelu_tanh(h)
    return jnp.einsum("bth,hc->btc", h, w2) + b2.reshape(-1)


if __name__ == "__main__":
    B, T, n_embd = 2, 8, 32
    hidden = 4 * n_embd

    key = jax.random.PRNGKey(0)
    kx, k1, k2, k3, k4 = jax.random.split(key, 5)

    x = jax.random.normal(kx, (B, T, n_embd), dtype=jnp.float32)
    # Params stored as (in, out), i.e. transpose of torch Linear.weight.
    w1 = jax.random.normal(k1, (n_embd, hidden), dtype=jnp.float32) * 0.02
    b1 = jax.random.normal(k2, (1, hidden), dtype=jnp.float32) * 0.02
    w2 = jax.random.normal(k3, (hidden, n_embd), dtype=jnp.float32) * 0.02
    b2 = jax.random.normal(k4, (1, n_embd), dtype=jnp.float32) * 0.02

    y = mlp_pallas(x, w1, b1, w2, b2)
    jax.block_until_ready(y)

    y_ref = mlp_reference(x, w1, b1, w2, b2)
    assert y.shape == (B, T, n_embd)
    # bf16 matmul inputs (and bf16 GELU on v6e/v7x) with f32 accumulation ->
    # loosened tolerance vs the f32 reference.
    max_err = float(jnp.max(jnp.abs(y - y_ref)))
    assert max_err < 2e-2, f"mismatch vs reference: max|diff|={max_err}"

    print("KERNEL_OK")
</pallas_src>

<mosaic_0001>
module attributes {stable_mosaic.version = 11 : i64} {
  func.func @mlp_kernel_resident(%arg0: i32, %arg1: memref<16x128xbf16, #tpu.memory_space<vmem>>, %arg2: memref<128x128xbf16, #tpu.memory_space<vmem>>, %arg3: memref<1x128xf32, #tpu.memory_space<vmem>>, %arg4: memref<128x128xbf16, #tpu.memory_space<vmem>>, %arg5: memref<1x128xf32, #tpu.memory_space<vmem>>, %arg6: memref<16x128xf32, #tpu.memory_space<vmem>>) attributes {dimension_semantics = [#tpu.dimension_semantics<parallel>], iteration_bounds = array<i64: 1>, scalar_prefetch = 0 : i64, scratch_operands = 0 : i64, tpu.core_type = #tpu.core_type<tc>, window_params = [{transform_indices = @transform_0, window_bounds = array<i64: 16, 128>}, {pipeline_mode = #tpu.pipeline_mode<synchronous>, transform_indices = @transform_1, window_bounds = array<i64: 128, 128>}, {pipeline_mode = #tpu.pipeline_mode<synchronous>, transform_indices = @transform_2, window_bounds = array<i64: 1, 128>}, {pipeline_mode = #tpu.pipeline_mode<synchronous>, transform_indices = @transform_3, window_bounds = array<i64: 128, 128>}, {pipeline_mode = #tpu.pipeline_mode<synchronous>, transform_indices = @transform_4, window_bounds = array<i64: 1, 128>}, {transform_indices = @transform_5, window_bounds = array<i64: 16, 128>}]} {
    %c0 = arith.constant 0 : index
    %c0_0 = arith.constant 0 : index
    %0 = vector.load %arg1[%c0, %c0_0] : memref<16x128xbf16, #tpu.memory_space<vmem>>, vector<16x128xbf16>
    %c0_1 = arith.constant 0 : index
    %c0_2 = arith.constant 0 : index
    %1 = vector.load %arg2[%c0_1, %c0_2] : memref<128x128xbf16, #tpu.memory_space<vmem>>, vector<128x128xbf16>
    %cst = arith.constant dense<0.000000e+00> : vector<16x128xf32>
    %2 = tpu.matmul %0, %1, %cst {dimension_numbers = #tpu.dot_dimension_numbers<[1], [0], [0], [1], [0, 0, 1, 1], [], []>} : vector<16x128xbf16>, vector<128x128xbf16>, vector<16x128xf32> -> vector<16x128xf32>
    %c0_3 = arith.constant 0 : index
    %c0_4 = arith.constant 0 : index
    %3 = vector.load %arg3[%c0_3, %c0_4] : memref<1x128xf32, #tpu.memory_space<vmem>>, vector<1x128xf32>
    %4 = vector.broadcast %3 : vector<1x128xf32> to vector<16x128xf32>
    %5 = arith.addf %2, %4 : vector<16x128xf32>
    %cst_5 = arith.constant 5.000000e-01 : f32
    %6 = vector.broadcast %cst_5 : f32 to vector<16x128xf32>
    %7 = arith.mulf %6, %5 : vector<16x128xf32>
    %cst_6 = arith.constant 0.797884583 : f32
    %8 = vector.broadcast %cst_6 : f32 to vector<16x128xf32>
    %9 = arith.mulf %8, %5 : vector<16x128xf32>
    %cst_7 = arith.constant 4.471500e-02 : f32
    %10 = vector.broadcast %cst_7 : f32 to vector<16x128xf32>
    %11 = arith.mulf %10, %5 : vector<16x128xf32>
    %12 = arith.mulf %11, %5 : vector<16x128xf32>
    %cst_8 = arith.constant 1.000000e+00 : f32
    %13 = vector.broadcast %cst_8 : f32 to vector<16x128xf32>
    %14 = arith.addf %13, %12 : vector<16x128xf32>
    %15 = arith.mulf %9, %14 : vector<16x128xf32>
    %16 = math.tanh %15 : vector<16x128xf32>
    %cst_9 = arith.constant 1.000000e+00 : f32
    %17 = vector.broadcast %cst_9 : f32 to vector<16x128xf32>
    %18 = arith.addf %17, %16 : vector<16x128xf32>
    %19 = arith.mulf %7, %18 : vector<16x128xf32>
    %20 = arith.truncf %19 : vector<16x128xf32> to vector<16x128xbf16>
    %c0_10 = arith.constant 0 : index
    %c0_11 = arith.constant 0 : index
    %21 = vector.load %arg4[%c0_10, %c0_11] : memref<128x128xbf16, #tpu.memory_space<vmem>>, vector<128x128xbf16>
    %cst_12 = arith.constant dense<0.000000e+00> : vector<16x128xf32>
    %22 = tpu.matmul %20, %21, %cst_12 {dimension_numbers = #tpu.dot_dimension_numbers<[1], [0], [0], [1], [0, 0, 1, 1], [], []>} : vector<16x128xbf16>, vector<128x128xbf16>, vector<16x128xf32> -> vector<16x128xf32>
    %c0_13 = arith.constant 0 : index
    %c0_14 = arith.constant 0 : index
    %23 = vector.load %arg5[%c0_13, %c0_14] : memref<1x128xf32, #tpu.memory_space<vmem>>, vector<1x128xf32>
    %24 = vector.broadcast %23 : vector<1x128xf32> to vector<16x128xf32>
    %25 = arith.addf %22, %24 : vector<16x128xf32>
    %c0_15 = arith.constant 0 : index
    %c0_16 = arith.constant 0 : index
    %26 = vector.load %arg6[%c0_15, %c0_16] : memref<16x128xf32, #tpu.memory_space<vmem>>, vector<16x128xf32>
    tpu.vector_store %arg6[%c0_15, %c0_16], %25 {strides = array<i32>} : memref<16x128xf32, #tpu.memory_space<vmem>>, vector<16x128xf32>,
    return
  }
  func.func @transform_0(%arg0: i32) -> (i32, i32) {
    %c0_i32 = arith.constant 0 : i32
    %c0_i32_0 = arith.constant 0 : i32
    return %arg0, %c0_i32 : i32, i32
  }
  func.func @transform_1(%arg0: i32) -> (i32, i32) {
    %c0_i32 = arith.constant 0 : i32
    %c0_i32_0 = arith.constant 0 : i32
    %c0_i32_1 = arith.constant 0 : i32
    return %c0_i32, %c0_i32_0 : i32, i32
  }
  func.func @transform_2(%arg0: i32) -> (i32, i32) {
    %c0_i32 = arith.constant 0 : i32
    %c0_i32_0 = arith.constant 0 : i32
    %c0_i32_1 = arith.constant 0 : i32
    return %c0_i32, %c0_i32_0 : i32, i32
  }
  func.func @transform_3(%arg0: i32) -> (i32, i32) {
    %c0_i32 = arith.constant 0 : i32
    %c0_i32_0 = arith.constant 0 : i32
    %c0_i32_1 = arith.constant 0 : i32
    return %c0_i32, %c0_i32_0 : i32, i32
  }
  func.func @transform_4(%arg0: i32) -> (i32, i32) {
    %c0_i32 = arith.constant 0 : i32
    %c0_i32_0 = arith.constant 0 : i32
    %c0_i32_1 = arith.constant 0 : i32
    return %c0_i32, %c0_i32_0 : i32, i32
  }
  func.func @transform_5(%arg0: i32) -> (i32, i32) {
    %c0_i32 = arith.constant 0 : i32
    %c0_i32_0 = arith.constant 0 : i32
    return %arg0, %c0_i32 : i32, i32
  }
}

</mosaic_0001>

<llo_original>
// kernel: mlp_pallas.1
$region0: #{mlp_pallas.1}
  #allocation0 [shape = 'u32[]', space=smem, size = 0x4, offset = 0x4, fixed_abs, tag = 'smem constant byte address 0x4 - core index']
  #allocation1 [shape = 'u32[144,128]{1,0:T(1,128)}', space=vmem, size = 0x12000, scoped, tag = 'internal scratch']
  %s0 = inlined_call_operand.vmem [shape: bf16[16,128], index: 0, kind: input, shape index: {}]
  %s1 = inlined_call_operand.vmem [shape: bf16[128,128], index: 1, kind: input, shape index: {}]
  %s2 = inlined_call_operand.vmem [shape: f32[1,128], index: 2, kind: input, shape index: {}]
  %s3 = inlined_call_operand.vmem [shape: bf16[128,128], index: 3, kind: input, shape index: {}]
  %s4 = inlined_call_operand.vmem [shape: f32[1,128], index: 4, kind: input, shape index: {}]
  %s5 = inlined_call_operand.vmem [shape: f32[16,128], index: 5, kind: output, shape index: {}]
  %s6 = sld [smem:[#allocation0]]
  $region30: #{mlp_pallas.1} parent=0
    _
  %s8 = ssub.s32 1, %s6
  %s9 = scalar_select 0, %s8, %s6
  // Predicated region
  $region2: #{mlp_pallas.1} parent=0 // pred_check
    _
  $region3: #{mlp_pallas.1} parent=0 // pred_check_branch
    %11 = sbr.rel (0) target = $region5
  $region4: #{mlp_pallas.1} parent=0 // pred_region
    _
  $region5: #{mlp_pallas.1} parent=0 // pred_fallthru
    _
  // Predicated region
  $region6: #{mlp_pallas.1} parent=0 // pred_check
    _
  $region7: #{mlp_pallas.1} parent=0 // pred_check_branch
    %13 = sbr.rel (0) target = $region9
  $region8: #{mlp_pallas.1} parent=0 // pred_region
    _
  $region9: #{mlp_pallas.1} parent=0 // pred_fallthru
    _
  // Predicated region
  $region10: #{mlp_pallas.1} parent=0 // pred_check
    _
  $region11: #{mlp_pallas.1} parent=0 // pred_check_branch
    %15 = sbr.rel (0) target = $region13
  $region12: #{mlp_pallas.1} parent=0 // pred_region
    _
  $region13: #{mlp_pallas.1} parent=0 // pred_fallthru
    _
  // Predicated region
  $region14: #{mlp_pallas.1} parent=0 // pred_check
    _
  $region15: #{mlp_pallas.1} parent=0 // pred_check_branch
    %17 = sbr.rel (0) target = $region17
  $region16: #{mlp_pallas.1} parent=0 // pred_region
    _
  $region17: #{mlp_pallas.1} parent=0 // pred_fallthru
    _
  // Predicated region
  $region18: #{mlp_pallas.1} parent=0 // pred_check
    _
  $region19: #{mlp_pallas.1} parent=0 // pred_check_branch
    %19 = sbr.rel (0) target = $region21
  $region20: #{mlp_pallas.1} parent=0 // pred_region
    _
  $region21: #{mlp_pallas.1} parent=0 // pred_fallthru
    _
  %v21 = vld [vmem:[%s0] sm:$0xf]
  %v22 = vld [vmem:[%s0 + $0x4] sm:$0xf]
  %v23 = vld [vmem:[%s1] sm:$0xf]
  %v24 = vld [vmem:[%s1 + $0x4] sm:$0xf]
  %v25 = vld [vmem:[%s1 + $0x8] sm:$0xf]
  %v26 = vld [vmem:[%s1 + $0xc] sm:$0xf]
  %v27 = vld [vmem:[%s1 + $0x10] sm:$0xf]
  %v28 = vld [vmem:[%s1 + $0x14] sm:$0xf]
  %v29 = vld [vmem:[%s1 + $0x18] sm:$0xf]
  %v30 = vld [vmem:[%s1 + $0x1c] sm:$0xf]
  %v31 = vld [vmem:[%s1 + $0x20] sm:$0xf]
  %v32 = vld [vmem:[%s1 + $0x24] sm:$0xf]
  %v33 = vld [vmem:[%s1 + $0x28] sm:$0xf]
  %v34 = vld [vmem:[%s1 + $0x2c] sm:$0xf]
  %v35 = vld [vmem:[%s1 + $0x30] sm:$0xf]
  %v36 = vld [vmem:[%s1 + $0x34] sm:$0xf]
  %v37 = vld [vmem:[%s1 + $0x38] sm:$0xf]
  %v38 = vld [vmem:[%s1 + $0x3c] sm:$0xf]
  %v39 = vld [vmem:[%s2] sm:$0x1]
  %v41 = vlaneseq
  %v42 = vshrl.u32 %v41, 7
  %v43 = vsub.s32 0, %v42
  %v44 = vrot.slane %v39, %v43
  %v48 = vunpack.c.l.b16 %v21
  %v49 = vunpack.c.l.b16 %v22
  %v50 = vpack.c.b16 %v49, %v48
  %v68 = vunpack.c.l.b16 %v23
  %v69 = vunpack.c.l.b16 %v24
  %v70 = vunpack.c.l.b16 %v25
  %v71 = vunpack.c.l.b16 %v26
  %v72 = vunpack.c.l.b16 %v27
  %v73 = vunpack.c.l.b16 %v28
  %v74 = vunpack.c.l.b16 %v29
  %v75 = vunpack.c.l.b16 %v30
  %v76 = vunpack.c.l.b16 %v31
  %v77 = vunpack.c.l.b16 %v32
  %v78 = vunpack.c.l.b16 %v33
  %v79 = vunpack.c.l.b16 %v34
  %v80 = vunpack.c.l.b16 %v35
  %v81 = vunpack.c.l.b16 %v36
  %v82 = vunpack.c.l.b16 %v37
  %v83 = vunpack.c.l.b16 %v38
  %v84 = vpack.c.b16 %v69, %v68
  %v85 = vpack.c.b16 %v71, %v70
  %v86 = vpack.c.b16 %v73, %v72
  %v87 = vpack.c.b16 %v75, %v74
  %v88 = vpack.c.b16 %v77, %v76
  %v89 = vpack.c.b16 %v79, %v78
  %v90 = vpack.c.b16 %v81, %v80
  %v91 = vpack.c.b16 %v83, %v82
  %100 = vmatprep.subr.bf16.mxu0 0
  %101 = vmatpush1.bf16.msra.mxu0 %v91
  %102 = vmatprep.subr.bf16.mxu0 0
  %103 = vmatpush1.bf16.msra.mxu0 %v90
  %104 = vmatprep.subr.bf16.mxu0 0
  %105 = vmatpush1.bf16.msra.mxu0 %v89
  %106 = vmatprep.subr.bf16.mxu0 0
  %107 = vmatpush1.bf16.msra.mxu0 %v88
  %108 = vmatprep.subr.bf16.mxu0 0
  %109 = vmatpush1.bf16.msra.mxu0 %v87
  %110 = vmatprep.subr.bf16.mxu0 0
  %111 = vmatpush1.bf16.msra.mxu0 %v86
  %112 = vmatprep.subr.bf16.mxu0 0
  %113 = vmatpush1.bf16.msra.mxu0 %v85
  %114 = vmatprep.subr.bf16.mxu0 0
  %115 = vmatpush1.bf16.msra.mxu0 %v84
  %116 = vmatprep.subr.bf16.mxu0 0
  %117 = vmatpush2.bf16.msra.mxu0 0
  %118 = vmatprep.subr.bf16.mxu0 0
  %119 = vmatpush2.bf16.msra.mxu0 0
  %120 = vmatprep.subr.bf16.mxu0 0
  %121 = vmatpush2.bf16.msra.mxu0 0
  %122 = vmatprep.subr.bf16.mxu0 0
  %123 = vmatpush2.bf16.msra.mxu0 0
  %124 = vmatprep.subr.bf16.mxu0 0
  %125 = vmatpush2.bf16.msra.mxu0 0
  %126 = vmatprep.subr.bf16.mxu0 0
  %127 = vmatpush2.bf16.msra.mxu0 0
  %128 = vmatprep.subr.bf16.mxu0 0
  %129 = vmatpush2.bf16.msra.mxu0 0
  %130 = vmatprep.subr.bf16.mxu0 0
  %131 = vmatpush2.bf16.msra.mxu0 0
  %132 = vmatprep.mubr.bf16.mxu0 0
  %133 = vmatmul.mubr.bf16.gmra.mxu0 %v50
  %v134 = vpop.f32.mrf.mxu0
  %v135 = vadd.f32 %v44, %v134
  %v136 = vpop.f32.mrf.mxu0
  %v137 = vpop.f32.mrf.mxu0
  %v138 = vadd.f32 %v44, %v137
  %v139 = vpop.f32.mrf.mxu0
  %140 = vdwg.mxu0
  %v141 = vmul.f32 %v135, 0.5
  %v142 = vmul.f32 %v138, 0.5
  %v143 = vmul.f32 %v135, 0.7978846
  %v144 = vmul.f32 %v138, 0.7978846
  %v145 = vmul.f32 %v135, 0.044715
  %v146 = vmul.f32 %v138, 0.044715
  %v147 = vmul.f32 %v145, %v135
  %v148 = vmul.f32 %v146, %v138
  %v149 = vadd.f32 %v147, 1.0
  %v150 = vadd.f32 %v148, 1.0
  %v151 = vmul.f32 %v143, %v149
  %v152 = vmul.f32 %v144, %v150
  %v153 = vtanh.pop %v151
  %v154 = vtanh.pop %v152
  %v155 = vadd.f32 %v153, 1.0
  %v156 = vadd.f32 %v154, 1.0
  %v157 = vmul.f32 %v141, %v155
  %v158 = vmul.f32 %v142, %v156
  %v159 = vpack.c.bf16 %v158, %v157
  %v160 = vld [vmem:[%s3] sm:$0xf]
  %v161 = vld [vmem:[%s3 + $0x4] sm:$0xf]
  %v162 = vld [vmem:[%s3 + $0x8] sm:$0xf]
  %v163 = vld [vmem:[%s3 + $0xc] sm:$0xf]
  %v164 = vld [vmem:[%s3 + $0x10] sm:$0xf]
  %v165 = vld [vmem:[%s3 + $0x14] sm:$0xf]
  %v166 = vld [vmem:[%s3 + $0x18] sm:$0xf]
  %v167 = vld [vmem:[%s3 + $0x1c] sm:$0xf]
  %v168 = vld [vmem:[%s3 + $0x20] sm:$0xf]
  %v169 = vld [vmem:[%s3 + $0x24] sm:$0xf]
  %v170 = vld [vmem:[%s3 + $0x28] sm:$0xf]
  %v171 = vld [vmem:[%s3 + $0x2c] sm:$0xf]
  %v172 = vld [vmem:[%s3 + $0x30] sm:$0xf]
  %v173 = vld [vmem:[%s3 + $0x34] sm:$0xf]
  %v174 = vld [vmem:[%s3 + $0x38] sm:$0xf]
  %v175 = vld [vmem:[%s3 + $0x3c] sm:$0xf]
  %v176 = vld [vmem:[%s4] sm:$0x1]
  %v178 = vlaneseq
  %v179 = vshrl.u32 %v178, 7
  %v180 = vsub.s32 0, %v179
  %v181 = vrot.slane %v176, %v180
  %v199 = vunpack.c.l.b16 %v160
  %v200 = vunpack.c.l.b16 %v161
  %v201 = vunpack.c.l.b16 %v162
  %v202 = vunpack.c.l.b16 %v163
  %v203 = vunpack.c.l.b16 %v164
  %v204 = vunpack.c.l.b16 %v165
  %v205 = vunpack.c.l.b16 %v166
  %v206 = vunpack.c.l.b16 %v167
  %v207 = vunpack.c.l.b16 %v168
  %v208 = vunpack.c.l.b16 %v169
  %v209 = vunpack.c.l.b16 %v170
  %v210 = vunpack.c.l.b16 %v171
  %v211 = vunpack.c.l.b16 %v172
  %v212 = vunpack.c.l.b16 %v173
  %v213 = vunpack.c.l.b16 %v174
  %v214 = vunpack.c.l.b16 %v175
  %v215 = vpack.c.b16 %v200, %v199
  %v216 = vpack.c.b16 %v202, %v201
  %v217 = vpack.c.b16 %v204, %v203
  %v218 = vpack.c.b16 %v206, %v205
  %v219 = vpack.c.b16 %v208, %v207
  %v220 = vpack.c.b16 %v210, %v209
  %v221 = vpack.c.b16 %v212, %v211
  %v222 = vpack.c.b16 %v214, %v213
  %231 = vmatprep.subr.bf16.mxu0 0
  %232 = vmatpush1.bf16.msra.mxu0 %v222
  %233 = vmatprep.subr.bf16.mxu0 0
  %234 = vmatpush1.bf16.msra.mxu0 %v221
  %235 = vmatprep.subr.bf16.mxu0 0
  %236 = vmatpush1.bf16.msra.mxu0 %v220
  %237 = vmatprep.subr.bf16.mxu0 0
  %238 = vmatpush1.bf16.msra.mxu0 %v219
  %239 = vmatprep.subr.bf16.mxu0 0
  %240 = vmatpush1.bf16.msra.mxu0 %v218
  %241 = vmatprep.subr.bf16.mxu0 0
  %242 = vmatpush1.bf16.msra.mxu0 %v217
  %243 = vmatprep.subr.bf16.mxu0 0
  %244 = vmatpush1.bf16.msra.mxu0 %v216
  %245 = vmatprep.subr.bf16.mxu0 0
  %246 = vmatpush1.bf16.msra.mxu0 %v215
  %247 = vmatprep.subr.bf16.mxu0 0
  %248 = vmatpush2.bf16.msra.mxu0 0
  %249 = vmatprep.subr.bf16.mxu0 0
  %250 = vmatpush2.bf16.msra.mxu0 0
  %251 = vmatprep.subr.bf16.mxu0 0
  %252 = vmatpush2.bf16.msra.mxu0 0
  %253 = vmatprep.subr.bf16.mxu0 0
  %254 = vmatpush2.bf16.msra.mxu0 0
  %255 = vmatprep.subr.bf16.mxu0 0
  %256 = vmatpush2.bf16.msra.mxu0 0
  %257 = vmatprep.subr.bf16.mxu0 0
  %258 = vmatpush2.bf16.msra.mxu0 0
  %259 = vmatprep.subr.bf16.mxu0 0
  %260 = vmatpush2.bf16.msra.mxu0 0
  %261 = vmatprep.subr.bf16.mxu0 0
  %262 = vmatpush2.bf16.msra.mxu0 0
  %263 = vmatprep.mubr.bf16.mxu0 0
  %264 = vmatmul.mubr.bf16.gmra.mxu0 %v159
  %v265 = vpop.f32.mrf.mxu0
  %v266 = vadd.f32 %v181, %v265
  %v267 = vpop.f32.mrf.mxu0
  %v268 = vpop.f32.mrf.mxu0
  %v269 = vadd.f32 %v181, %v268
  %v270 = vpop.f32.mrf.mxu0
  %271 = vdwg.mxu0
  %272 = vst [vmem:[%s5] sm:$0xff] %v266
  %273 = vst [vmem:[%s5 + $0x8] sm:$0xff] %v269
  // Predicated region
  $region22: #{mlp_pallas.1} parent=0 // pred_check
    _
  $region23: #{mlp_pallas.1} parent=0 // pred_check_branch
    %275 = sbr.rel (0) target = $region25
  $region24: #{mlp_pallas.1} parent=0 // pred_region
    _
  $region25: #{mlp_pallas.1} parent=0 // pred_fallthru
    _
  // Predicated region
  $region26: #{mlp_pallas.1} parent=0 // pred_check
    _
  $region27: #{mlp_pallas.1} parent=0 // pred_check_branch
    %277 = sbr.rel (0) target = $region29
  $region28: #{mlp_pallas.1} parent=0 // pred_region
    _
  $region29: #{mlp_pallas.1} parent=0 // pred_fallthru
    _

</llo_original>
